<compile_context>
chip_gen: v7x
topology: tpu7x:2x2x1
jax: 0.10.0
libtpu: 0.0.40
codegen_flags: <defaults>
</compile_context>

<pallas_src>
import jax
import jax.numpy as jnp
from jax.experimental import pallas as pl
from jax.experimental.pallas import tpu as pltpu

EPS = 1e-5
NEG_SLOPE = 0.01
LANE = 128  # lane width; every feature dim is padded to this


def mlp_kernel(x_ref, vec_ref, w_ref, o_ref):
    # x_ref:   (N, 128)      f32 — input, features lane-padded with zeros
    # vec_ref: (8, 128)      f32 — rows: g0,b0,g1,b1,g2,b2,bias3,<unused>
    # w_ref:   (3, 128, 128) f32 — padded W1, W2, W3 (stored as in x out)
    # o_ref:   (N, 128)      f32 — lane-dense output slab
    x = x_ref[...]

    def bn(h, g, b):
        # Training-mode BatchNorm1d folded into one FMA.
        mu = jnp.mean(h, axis=0, keepdims=True)
        var = jnp.mean(jnp.square(h - mu), axis=0, keepdims=True)
        scale = jax.lax.rsqrt(var + EPS) * g
        shift = b - mu * scale
        return h * scale + shift

    def leaky(h):
        return jnp.where(h > 0, h, NEG_SLOPE * h)

    g0 = vec_ref[0:1, :]
    b0 = vec_ref[1:2, :]
    g1 = vec_ref[2:3, :]
    b1 = vec_ref[3:4, :]
    g2 = vec_ref[4:5, :]
    b2 = vec_ref[5:6, :]
    bias3 = vec_ref[6:7, :]

    # norm -> fc1   (fc1 bias omitted: exactly cancelled by the next BN's mean
    #                subtraction in training mode)
    h = bn(x, g0, b0)
    h = jnp.dot(h, w_ref[0], preferred_element_type=jnp.float32)

    # norm1 -> act -> (dropout p=0) -> fc2   (fc2 bias omitted, same reason)
    h = leaky(bn(h, g1, b1))
    h = jnp.dot(h, w_ref[1], preferred_element_type=jnp.float32)

    # norm2 -> act -> (dropout p=0) -> fc3 (+ bias3)
    h = leaky(bn(h, g2, b2))
    out = jnp.dot(h, w_ref[2], preferred_element_type=jnp.float32) + bias3

    o_ref[...] = out  # full-lane, unmasked store


def mlp_forward(x, params):
    """x: (N, in_dim) float32. params: dict of arrays (see init_params)."""
    n, in_dim = x.shape
    out_dim = params["w3"].shape[1]

    # --- wrapper-side packing / lane padding (pure XLA, cheap) -------------
    x_p = jnp.pad(x.astype(jnp.float32), ((0, 0), (0, LANE - in_dim)))

    def pad_vec(v):
        v = v.reshape(1, -1).astype(jnp.float32)
        return jnp.pad(v, ((0, 0), (0, LANE - v.shape[1])))

    # One (8,128) slab = one DMA = one vreg tile for all small vectors.
    vecs = jnp.concatenate(
        [
            pad_vec(params["g0"]), pad_vec(params["b0"]),
            pad_vec(params["g1"]), pad_vec(params["b1"]),
            pad_vec(params["g2"]), pad_vec(params["b2"]),
            pad_vec(params["bias3"]),
            jnp.zeros((1, LANE), jnp.float32),
        ],
        axis=0,
    )

    def pad_w(w):
        r, c = w.shape
        return jnp.pad(w.astype(jnp.float32), ((0, LANE - r), (0, LANE - c)))

    # One (3,128,128) slab = one DMA for all three weight matrices.
    w_all = jnp.stack([pad_w(params["w1"]), pad_w(params["w2"]), pad_w(params["w3"])])

    vmem = pl.BlockSpec(memory_space=pltpu.MemorySpace.VMEM)
    out_p = pl.pallas_call(
        mlp_kernel,
        out_shape=jax.ShapeDtypeStruct((n, LANE), jnp.float32),
        in_specs=[vmem, vmem, vmem],
        out_specs=vmem,
    )(x_p, vecs, w_all)

    # Slice the real output features out of the lane-dense slab.
    return out_p[:, :out_dim]


def init_params(key, in_dim=23, hid1=64, hid2=16, out_dim=2):
    """Deterministic init mimicking PyTorch defaults (uniform +-1/sqrt(fan_in))."""
    ks = jax.random.split(key, 6)

    def linear(kw, kb, fan_in, fan_out):
        bound = 1.0 / jnp.sqrt(fan_in)
        # stored transposed: (in, out)
        w = jax.random.uniform(kw, (fan_in, fan_out), jnp.float32, -bound, bound)
        b = jax.random.uniform(kb, (fan_out,), jnp.float32, -bound, bound)
        return w, b

    w1, bias1 = linear(ks[0], ks[1], in_dim, hid1)
    w2, bias2 = linear(ks[2], ks[3], hid1, hid2)
    w3, bias3 = linear(ks[4], ks[5], hid2, out_dim)

    return dict(
        # BatchNorm affine params: PyTorch defaults weight=1, bias=0.
        g0=jnp.ones((in_dim,), jnp.float32), b0=jnp.zeros((in_dim,), jnp.float32),
        g1=jnp.ones((hid1,), jnp.float32),   b1=jnp.zeros((hid1,), jnp.float32),
        g2=jnp.ones((hid2,), jnp.float32),   b2=jnp.zeros((hid2,), jnp.float32),
        w1=w1, bias1=bias1,   # bias1/bias2 kept only for the reference check;
        w2=w2, bias2=bias2,   # they are mathematically dead in the forward pass
        w3=w3, bias3=bias3,
    )


def _reference(x, p):
    """Pure-JAX reference: the literal PyTorch forward (including fc1/fc2 bias)."""

    def bn(h, g, b):
        mu = jnp.mean(h, axis=0, keepdims=True)
        var = jnp.mean((h - mu) * (h - mu), axis=0, keepdims=True)
        return (h - mu) * jax.lax.rsqrt(var + EPS) * g + b

    def leaky(h):
        return jnp.where(h > 0, h, NEG_SLOPE * h)

    h = bn(x, p["g0"], p["b0"])
    h = h @ p["w1"] + p["bias1"]
    h = leaky(bn(h, p["g1"], p["b1"]))
    h = h @ p["w2"] + p["bias2"]
    h = leaky(bn(h, p["g2"], p["b2"]))
    return h @ p["w3"] + p["bias3"]


if __name__ == "__main__":
    key = jax.random.PRNGKey(0)
    k_x, k_p = jax.random.split(key)

    N, IN_DIM = 8, 23
    x = jax.random.normal(k_x, (N, IN_DIM), jnp.float32)
    params = init_params(k_p, in_dim=IN_DIM, hid1=64, hid2=16, out_dim=2)

    out = jax.block_until_ready(mlp_forward(x, params))

    ref = _reference(x, params)
    assert out.shape == (N, 2)
    assert jnp.allclose(out, ref, atol=1e-4, rtol=1e-4), float(
        jnp.max(jnp.abs(out - ref))
    )

    print("KERNEL_OK")
</pallas_src>

<mosaic_0001>
module attributes {stable_mosaic.version = 11 : i64} {
  func.func @mlp_kernel(%arg0: memref<8x128xf32, #tpu.memory_space<vmem>>, %arg1: memref<8x128xf32, #tpu.memory_space<vmem>>, %arg2: memref<3x128x128xf32, #tpu.memory_space<vmem>>, %arg3: memref<8x128xf32, #tpu.memory_space<vmem>>) attributes {dimension_semantics = [], scalar_prefetch = 0 : i64, scratch_operands = 0 : i64, tpu.core_type = #tpu.core_type<tc>} {
    %c0 = arith.constant 0 : index
    %c0_0 = arith.constant 0 : index
    %0 = vector.load %arg0[%c0, %c0_0] : memref<8x128xf32, #tpu.memory_space<vmem>>, vector<8x128xf32>
    %c0_1 = arith.constant 0 : index
    %c0_2 = arith.constant 0 : index
    %1 = vector.load %arg1[%c0_1, %c0_2] : memref<8x128xf32, #tpu.memory_space<vmem>>, vector<1x128xf32>
    %c1 = arith.constant 1 : index
    %c0_3 = arith.constant 0 : index
    %2 = vector.load %arg1[%c1, %c0_3] : memref<8x128xf32, #tpu.memory_space<vmem>>, vector<1x128xf32>
    %c2 = arith.constant 2 : index
    %c0_4 = arith.constant 0 : index
    %3 = vector.load %arg1[%c2, %c0_4] : memref<8x128xf32, #tpu.memory_space<vmem>>, vector<1x128xf32>
    %c3 = arith.constant 3 : index
    %c0_5 = arith.constant 0 : index
    %4 = vector.load %arg1[%c3, %c0_5] : memref<8x128xf32, #tpu.memory_space<vmem>>, vector<1x128xf32>
    %c4 = arith.constant 4 : index
    %c0_6 = arith.constant 0 : index
    %5 = vector.load %arg1[%c4, %c0_6] : memref<8x128xf32, #tpu.memory_space<vmem>>, vector<1x128xf32>
    %c5 = arith.constant 5 : index
    %c0_7 = arith.constant 0 : index
    %6 = vector.load %arg1[%c5, %c0_7] : memref<8x128xf32, #tpu.memory_space<vmem>>, vector<1x128xf32>
    %c6 = arith.constant 6 : index
    %c0_8 = arith.constant 0 : index
    %7 = vector.load %arg1[%c6, %c0_8] : memref<8x128xf32, #tpu.memory_space<vmem>>, vector<1x128xf32>
    %cst = arith.constant dense<0.000000e+00> : vector<128xf32>
    %8 = vector.multi_reduction <add>, %0, %cst [0] : vector<8x128xf32> to vector<128xf32>
    %9 = vector.shape_cast %8 : vector<128xf32> to vector<1x128xf32>
    %cst_9 = arith.constant 8.000000e+00 : f32
    %10 = vector.broadcast %cst_9 : f32 to vector<1x128xf32>
    %11 = arith.divf %9, %10 : vector<1x128xf32>
    %12 = vector.broadcast %11 : vector<1x128xf32> to vector<8x128xf32>
    %13 = arith.subf %0, %12 : vector<8x128xf32>
    %14 = arith.mulf %13, %13 : vector<8x128xf32>
    %cst_10 = arith.constant dense<0.000000e+00> : vector<128xf32>
    %15 = vector.multi_reduction <add>, %14, %cst_10 [0] : vector<8x128xf32> to vector<128xf32>
    %16 = vector.shape_cast %15 : vector<128xf32> to vector<1x128xf32>
    %cst_11 = arith.constant 8.000000e+00 : f32
    %17 = vector.broadcast %cst_11 : f32 to vector<1x128xf32>
    %18 = arith.divf %16, %17 : vector<1x128xf32>
    %cst_12 = arith.constant 9.99999974E-6 : f32
    %19 = vector.broadcast %cst_12 : f32 to vector<1x128xf32>
    %20 = arith.addf %18, %19 : vector<1x128xf32>
    %21 = math.rsqrt %20 : vector<1x128xf32>
    %22 = arith.mulf %21, %1 : vector<1x128xf32>
    %23 = arith.mulf %11, %22 : vector<1x128xf32>
    %24 = arith.subf %2, %23 : vector<1x128xf32>
    %25 = vector.broadcast %22 : vector<1x128xf32> to vector<8x128xf32>
    %26 = arith.mulf %0, %25 : vector<8x128xf32>
    %27 = vector.broadcast %24 : vector<1x128xf32> to vector<8x128xf32>
    %28 = arith.addf %26, %27 : vector<8x128xf32>
    %c0_13 = arith.constant 0 : index
    %c0_14 = arith.constant 0 : index
    %c0_15 = arith.constant 0 : index
    %29 = vector.load %arg2[%c0_13, %c0_14, %c0_15] : memref<3x128x128xf32, #tpu.memory_space<vmem>>, vector<1x128x128xf32>
    %30 = vector.shape_cast %29 : vector<1x128x128xf32> to vector<128x128xf32>
    %cst_16 = arith.constant dense<0.000000e+00> : vector<8x128xf32>
    %31 = tpu.matmul %28, %30, %cst_16 {dimension_numbers = #tpu.dot_dimension_numbers<[1], [0], [0], [1], [0, 0, 1, 1], [], []>} : vector<8x128xf32>, vector<128x128xf32>, vector<8x128xf32> -> vector<8x128xf32>
    %cst_17 = arith.constant dense<0.000000e+00> : vector<128xf32>
    %32 = vector.multi_reduction <add>, %31, %cst_17 [0] : vector<8x128xf32> to vector<128xf32>
    %33 = vector.shape_cast %32 : vector<128xf32> to vector<1x128xf32>
    %cst_18 = arith.constant 8.000000e+00 : f32
    %34 = vector.broadcast %cst_18 : f32 to vector<1x128xf32>
    %35 = arith.divf %33, %34 : vector<1x128xf32>
    %36 = vector.broadcast %35 : vector<1x128xf32> to vector<8x128xf32>
    %37 = arith.subf %31, %36 : vector<8x128xf32>
    %38 = arith.mulf %37, %37 : vector<8x128xf32>
    %cst_19 = arith.constant dense<0.000000e+00> : vector<128xf32>
    %39 = vector.multi_reduction <add>, %38, %cst_19 [0] : vector<8x128xf32> to vector<128xf32>
    %40 = vector.shape_cast %39 : vector<128xf32> to vector<1x128xf32>
    %cst_20 = arith.constant 8.000000e+00 : f32
    %41 = vector.broadcast %cst_20 : f32 to vector<1x128xf32>
    %42 = arith.divf %40, %41 : vector<1x128xf32>
    %cst_21 = arith.constant 9.99999974E-6 : f32
    %43 = vector.broadcast %cst_21 : f32 to vector<1x128xf32>
    %44 = arith.addf %42, %43 : vector<1x128xf32>
    %45 = math.rsqrt %44 : vector<1x128xf32>
    %46 = arith.mulf %45, %3 : vector<1x128xf32>
    %47 = arith.mulf %35, %46 : vector<1x128xf32>
    %48 = arith.subf %4, %47 : vector<1x128xf32>
    %49 = vector.broadcast %46 : vector<1x128xf32> to vector<8x128xf32>
    %50 = arith.mulf %31, %49 : vector<8x128xf32>
    %51 = vector.broadcast %48 : vector<1x128xf32> to vector<8x128xf32>
    %52 = arith.addf %50, %51 : vector<8x128xf32>
    %cst_22 = arith.constant 0.000000e+00 : f32
    %53 = vector.broadcast %cst_22 : f32 to vector<8x128xf32>
    %54 = arith.cmpf ogt, %52, %53 : vector<8x128xf32>
    %cst_23 = arith.constant 0.00999999977 : f32
    %55 = vector.broadcast %cst_23 : f32 to vector<8x128xf32>
    %56 = arith.mulf %55, %52 : vector<8x128xf32>
    %57 = arith.select %54, %52, %56 : vector<8x128xi1>, vector<8x128xf32>
    %c1_24 = arith.constant 1 : index
    %c0_25 = arith.constant 0 : index
    %c0_26 = arith.constant 0 : index
    %58 = vector.load %arg2[%c1_24, %c0_25, %c0_26] : memref<3x128x128xf32, #tpu.memory_space<vmem>>, vector<1x128x128xf32>
    %59 = vector.shape_cast %58 : vector<1x128x128xf32> to vector<128x128xf32>
    %cst_27 = arith.constant dense<0.000000e+00> : vector<8x128xf32>
    %60 = tpu.matmul %57, %59, %cst_27 {dimension_numbers = #tpu.dot_dimension_numbers<[1], [0], [0], [1], [0, 0, 1, 1], [], []>} : vector<8x128xf32>, vector<128x128xf32>, vector<8x128xf32> -> vector<8x128xf32>
    %cst_28 = arith.constant dense<0.000000e+00> : vector<128xf32>
    %61 = vector.multi_reduction <add>, %60, %cst_28 [0] : vector<8x128xf32> to vector<128xf32>
    %62 = vector.shape_cast %61 : vector<128xf32> to vector<1x128xf32>
    %cst_29 = arith.constant 8.000000e+00 : f32
    %63 = vector.broadcast %cst_29 : f32 to vector<1x128xf32>
    %64 = arith.divf %62, %63 : vector<1x128xf32>
    %65 = vector.broadcast %64 : vector<1x128xf32> to vector<8x128xf32>
    %66 = arith.subf %60, %65 : vector<8x128xf32>
    %67 = arith.mulf %66, %66 : vector<8x128xf32>
    %cst_30 = arith.constant dense<0.000000e+00> : vector<128xf32>
    %68 = vector.multi_reduction <add>, %67, %cst_30 [0] : vector<8x128xf32> to vector<128xf32>
    %69 = vector.shape_cast %68 : vector<128xf32> to vector<1x128xf32>
    %cst_31 = arith.constant 8.000000e+00 : f32
    %70 = vector.broadcast %cst_31 : f32 to vector<1x128xf32>
    %71 = arith.divf %69, %70 : vector<1x128xf32>
    %cst_32 = arith.constant 9.99999974E-6 : f32
    %72 = vector.broadcast %cst_32 : f32 to vector<1x128xf32>
    %73 = arith.addf %71, %72 : vector<1x128xf32>
    %74 = math.rsqrt %73 : vector<1x128xf32>
    %75 = arith.mulf %74, %5 : vector<1x128xf32>
    %76 = arith.mulf %64, %75 : vector<1x128xf32>
    %77 = arith.subf %6, %76 : vector<1x128xf32>
    %78 = vector.broadcast %75 : vector<1x128xf32> to vector<8x128xf32>
    %79 = arith.mulf %60, %78 : vector<8x128xf32>
    %80 = vector.broadcast %77 : vector<1x128xf32> to vector<8x128xf32>
    %81 = arith.addf %79, %80 : vector<8x128xf32>
    %cst_33 = arith.constant 0.000000e+00 : f32
    %82 = vector.broadcast %cst_33 : f32 to vector<8x128xf32>
    %83 = arith.cmpf ogt, %81, %82 : vector<8x128xf32>
    %cst_34 = arith.constant 0.00999999977 : f32
    %84 = vector.broadcast %cst_34 : f32 to vector<8x128xf32>
    %85 = arith.mulf %84, %81 : vector<8x128xf32>
    %86 = arith.select %83, %81, %85 : vector<8x128xi1>, vector<8x128xf32>
    %c2_35 = arith.constant 2 : index
    %c0_36 = arith.constant 0 : index
    %c0_37 = arith.constant 0 : index
    %87 = vector.load %arg2[%c2_35, %c0_36, %c0_37] : memref<3x128x128xf32, #tpu.memory_space<vmem>>, vector<1x128x128xf32>
    %88 = vector.shape_cast %87 : vector<1x128x128xf32> to vector<128x128xf32>
    %cst_38 = arith.constant dense<0.000000e+00> : vector<8x128xf32>
    %89 = tpu.matmul %86, %88, %cst_38 {dimension_numbers = #tpu.dot_dimension_numbers<[1], [0], [0], [1], [0, 0, 1, 1], [], []>} : vector<8x128xf32>, vector<128x128xf32>, vector<8x128xf32> -> vector<8x128xf32>
    %90 = vector.broadcast %7 : vector<1x128xf32> to vector<8x128xf32>
    %91 = arith.addf %89, %90 : vector<8x128xf32>
    %c0_39 = arith.constant 0 : index
    %c0_40 = arith.constant 0 : index
    %92 = vector.load %arg3[%c0_39, %c0_40] : memref<8x128xf32, #tpu.memory_space<vmem>>, vector<8x128xf32>
    tpu.vector_store %arg3[%c0_39, %c0_40], %91 {strides = array<i32>} : memref<8x128xf32, #tpu.memory_space<vmem>>, vector<8x128xf32>,
    return
  }
}

</mosaic_0001>

<llo_original>
// kernel: tpu_custom_call.1
$region0: #{tpu_custom_call.1}
  #allocation0 [shape = 'u32[]', space=smem, size = 0x4, offset = 0x4, fixed_abs, tag = 'smem constant byte address 0x4 - core index']
  #allocation1 [shape = 'u32[144,128]{1,0:T(1,128)}', space=vmem, size = 0x12000, scoped, tag = 'internal scratch']
  %s0 = inlined_call_operand.hbm [shape: f32[8,128], index: 0, kind: input, shape index: {}]
  %s1 = inlined_call_operand.hbm [shape: f32[8,128], index: 1, kind: input, shape index: {}]
  %s2 = inlined_call_operand.hbm [shape: f32[3,128,128], index: 2, kind: input, shape index: {}]
  %s3 = inlined_call_operand.hbm [shape: f32[8,128], index: 3, kind: output, shape index: {}]
  %s4 = sld [smem:[#allocation0]]
  $region34: #{tpu_custom_call.1} parent=0
    _
  %s6 = ssub.s32 1, %s4
  %s7 = scalar_select 0, %s6, %s4
  $region1: #{tpu_custom_call.1} parent=0
    #allocation2 [shape = 'u8[4096]{0}', space=vmem, size = 0x1000, scoped, tag = 'input window, operand 0, single buffered']
    #allocation3 [shape = 's32[1]{0}', space=sflag, size = 0x4, scoped, tag = 'scoped memory for tpu_custom_call.1']
    #allocation4 [shape = 's32[1]{0}', space=sflag, size = 0x4, scoped, tag = 'scoped memory for tpu_custom_call.1']
    #allocation5 [shape = 'u8[4096]{0}', space=vmem, size = 0x1000, scoped, tag = 'input window, operand 1, single buffered']
    #allocation6 [shape = 's32[1]{0}', space=sflag, size = 0x4, scoped, tag = 'scoped memory for tpu_custom_call.1']
    #allocation7 [shape = 'u8[196608]{0}', space=vmem, size = 0x30000, scoped, tag = 'input window, operand 2, single buffered']
    #allocation8 [shape = 'u8[4096]{0}', space=vmem, size = 0x1000, scoped, tag = 'output window, operand 0, single buffered']
    %8 = vsyncpa [#allocation3], 0
    %9 = vsyncpa [#allocation6], 0
    %10 = vsyncpa [#allocation4], 0
    // Predicated region
    $region2: #{tpu_custom_call.1} parent=1 // pred_check
      _
    $region3: #{tpu_custom_call.1} parent=1 // pred_check_branch
      %12 = sbr.rel (0) target = $region5
    $region4: #{tpu_custom_call.1} parent=1 // pred_region
      %s14 = ssub.s32 128, 128
      %15 = vsyncadd [#allocation3], %s14
      %s17 = sshll.u32 [#allocation2], 4
      %s18 = int_to_ptr.vmem [resolvable:$true] %s17
      %20 = dma.hbm_to_vmem [thread:$0]  %s0, 128, %s18, [#allocation3]
    $region5: #{tpu_custom_call.1} parent=1 // pred_fallthru
      _
    // Predicated region
    $region6: #{tpu_custom_call.1} parent=1 // pred_check
      _
    $region7: #{tpu_custom_call.1} parent=1 // pred_check_branch
      %22 = sbr.rel (0) target = $region9
    $region8: #{tpu_custom_call.1} parent=1 // pred_region
      %s24 = ssub.s32 128, 128
      %25 = vsyncadd [#allocation6], %s24
      %s27 = sshll.u32 [#allocation5], 4
      %s28 = int_to_ptr.vmem [resolvable:$true] %s27
      %30 = dma.hbm_to_vmem [thread:$0]  %s1, 128, %s28, [#allocation6]
    $region9: #{tpu_custom_call.1} parent=1 // pred_fallthru
      _
    // Predicated region
    $region10: #{tpu_custom_call.1} parent=1 // pred_check
      _
    $region11: #{tpu_custom_call.1} parent=1 // pred_check_branch
      %32 = sbr.rel (0) target = $region13
    $region12: #{tpu_custom_call.1} parent=1 // pred_region
      %s34 = ssub.s32 6144, 6144
      %35 = vsyncadd [#allocation6], %s34
      %s36 = sshll.u32 [#allocation7], 4
      %s37 = int_to_ptr.vmem [resolvable:$true] %s36
      %42 = dma.hbm_to_vmem [thread:$0]  %s2, 6144, %s37, [#allocation6], 128, 128, 8
    $region13: #{tpu_custom_call.1} parent=1 // pred_fallthru
      _
    // Predicated region
    $region14: #{tpu_custom_call.1} parent=1 // pred_check
      _
    $region15: #{tpu_custom_call.1} parent=1 // pred_check_branch
      %44 = sbr.rel (0) target = $region17
    $region16: #{tpu_custom_call.1} parent=1 // pred_region
      %45 = dma.done [#allocation3], 128
    $region17: #{tpu_custom_call.1} parent=1 // pred_fallthru
      _
    // Predicated region
    $region18: #{tpu_custom_call.1} parent=1 // pred_check
      _
    $region19: #{tpu_custom_call.1} parent=1 // pred_check_branch
      %47 = sbr.rel (0) target = $region21
    $region20: #{tpu_custom_call.1} parent=1 // pred_region
      %48 = dma.done [#allocation6], 128
    $region21: #{tpu_custom_call.1} parent=1 // pred_fallthru
      _
    // Predicated region
    $region22: #{tpu_custom_call.1} parent=1 // pred_check
      _
    $region23: #{tpu_custom_call.1} parent=1 // pred_check_branch
      %50 = sbr.rel (0) target = $region25
    $region24: #{tpu_custom_call.1} parent=1 // pred_region
      %51 = dma.done [#allocation6], 6144
    $region25: #{tpu_custom_call.1} parent=1 // pred_fallthru
      _
    %v52 = vld [vmem:[#allocation2] sm:$0xff]
    %v53 = vld [vmem:[#allocation5] sm:$0x1]
    %v54 = vld [vmem:[#allocation5 + $0x1] sm:$0x1]
    %v55 = vld [vmem:[#allocation5 + $0x2] sm:$0x1]
    %v56 = vld [vmem:[#allocation5 + $0x3] sm:$0x1]
    %v57 = vld [vmem:[#allocation5 + $0x4] sm:$0x1]
    %v58 = vld [vmem:[#allocation5 + $0x5] sm:$0x1]
    %v59 = vld [vmem:[#allocation5 + $0x6] sm:$0x1]
    %v60 = vrot.slane %v52, 4
    %v61 = vadd.f32 %v52, %v60
    %v62 = vrot.slane %v61, 2
    %v63 = vadd.f32 %v61, %v62
    %v64 = vrot.slane %v63, 1
    %v65 = vadd.f32 %v63, %v64
    %v66 = vrcp.pop 8.0
    %v67 = vmul.f32 %v65, %v66
    %v68 = vsub.f32 %v52, %v67
    %v69 = vmul.f32 %v68, %v68
    %v70 = vrot.slane %v69, 4
    %v71 = vadd.f32 %v69, %v70
    %v72 = vrot.slane %v71, 2
    %v73 = vadd.f32 %v71, %v72
    %v74 = vrot.slane %v73, 1
    %v75 = vadd.f32 %v73, %v74
    %v76 = vmul.f32 %v75, %v66
    %v77 = vadd.f32 %v76, 1e-05
    %v78 = vrsqrt.pop %v77
    %v79 = vmul.f32 %v78, %v53
    %v80 = vmul.f32 %v67, %v79
    %v81 = vsub.f32 %v54, %v80
    %v82 = vlaneseq
    %v83 = vshrl.u32 %v82, 7
    %v84 = vsub.s32 0, %v83
    %v85 = vrot.slane %v79, %v84
    %v86 = vmul.f32 %v52, %v85
    %v87 = vlaneseq
    %v88 = vshrl.u32 %v87, 7
    %v89 = vsub.s32 0, %v88
    %v90 = vrot.slane %v81, %v89
    %v91 = vadd.f32 %v86, %v90
    %v92 = vld [vmem:[#allocation7] sm:$0xff]
    %v93 = vld [vmem:[#allocation7 + $0x8] sm:$0xff]
    %v94 = vld [vmem:[#allocation7 + $0x10] sm:$0xff]
    %v95 = vld [vmem:[#allocation7 + $0x18] sm:$0xff]
    %v96 = vld [vmem:[#allocation7 + $0x20] sm:$0xff]
    %v97 = vld [vmem:[#allocation7 + $0x28] sm:$0xff]
    %v98 = vld [vmem:[#allocation7 + $0x30] sm:$0xff]
    %v99 = vld [vmem:[#allocation7 + $0x38] sm:$0xff]
    %v100 = vld [vmem:[#allocation7 + $0x40] sm:$0xff]
    %v101 = vld [vmem:[#allocation7 + $0x48] sm:$0xff]
    %v102 = vld [vmem:[#allocation7 + $0x50] sm:$0xff]
    %v103 = vld [vmem:[#allocation7 + $0x58] sm:$0xff]
    %v104 = vld [vmem:[#allocation7 + $0x60] sm:$0xff]
    %v105 = vld [vmem:[#allocation7 + $0x68] sm:$0xff]
    %v106 = vld [vmem:[#allocation7 + $0x70] sm:$0xff]
    %v107 = vld [vmem:[#allocation7 + $0x78] sm:$0xff]
    %108 = vmatprep.subr.mxu0 0.0
    %109 = vmatpush1.msra.mxu0 %v92
    %110 = vmatprep.subr.mxu0 0.0
    %111 = vmatpush1.msra.mxu0 %v93
    %112 = vmatprep.subr.mxu0 0.0
    %113 = vmatpush1.msra.mxu0 %v94
    %114 = vmatprep.subr.mxu0 0.0
    %115 = vmatpush1.msra.mxu0 %v95
    %116 = vmatprep.subr.mxu0 0.0
    %117 = vmatpush1.msra.mxu0 %v96
    %118 = vmatprep.subr.mxu0 0.0
    %119 = vmatpush1.msra.mxu0 %v97
    %120 = vmatprep.subr.mxu0 0.0
    %121 = vmatpush1.msra.mxu0 %v98
    %122 = vmatprep.subr.mxu0 0.0
    %123 = vmatpush1.msra.mxu0 %v99
    %124 = vmatprep.subr.mxu0 0.0
    %125 = vmatpush1.msra.mxu0 %v100
    %126 = vmatprep.subr.mxu0 0.0
    %127 = vmatpush1.msra.mxu0 %v101
    %128 = vmatprep.subr.mxu0 0.0
    %129 = vmatpush1.msra.mxu0 %v102
    %130 = vmatprep.subr.mxu0 0.0
    %131 = vmatpush1.msra.mxu0 %v103
    %132 = vmatprep.subr.mxu0 0.0
    %133 = vmatpush1.msra.mxu0 %v104
    %134 = vmatprep.subr.mxu0 0.0
    %135 = vmatpush1.msra.mxu0 %v105
    %136 = vmatprep.subr.mxu0 0.0
    %137 = vmatpush1.msra.mxu0 %v106
    %138 = vmatprep.subr.mxu0 0.0
    %139 = vmatpush1.msra.mxu0 %v107
    %140 = vmatprep.subr.mxu0 0.0
    %141 = vmatpush1.msra.mxu0 0.0
    %142 = vmatprep.subr.mxu0 0.0
    %143 = vmatpush1.msra.mxu0 0.0
    %144 = vmatprep.subr.mxu0 0.0
    %145 = vmatpush1.msra.mxu0 0.0
    %146 = vmatprep.subr.mxu0 0.0
    %147 = vmatpush1.msra.mxu0 0.0
    %148 = vmatprep.subr.mxu0 0.0
    %149 = vmatpush1.msra.mxu0 0.0
    %150 = vmatprep.subr.mxu0 0.0
    %151 = vmatpush1.msra.mxu0 0.0
    %152 = vmatprep.subr.mxu0 0.0
    %153 = vmatpush1.msra.mxu0 0.0
    %154 = vmatprep.subr.mxu0 0.0
    %155 = vmatpush1.msra.mxu0 0.0
    %156 = vmatprep.subr.mxu0 0.0
    %157 = vmatpush1.msra.mxu0 0.0
    %158 = vmatprep.subr.mxu0 0.0
    %159 = vmatpush1.msra.mxu0 0.0
    %160 = vmatprep.subr.mxu0 0.0
    %161 = vmatpush1.msra.mxu0 0.0
    %162 = vmatprep.subr.mxu0 0.0
    %163 = vmatpush1.msra.mxu0 0.0
    %164 = vmatprep.subr.mxu0 0.0
    %165 = vmatpush1.msra.mxu0 0.0
    %166 = vmatprep.subr.mxu0 0.0
    %167 = vmatpush1.msra.mxu0 0.0
    %168 = vmatprep.subr.mxu0 0.0
    %169 = vmatpush1.msra.mxu0 0.0
    %170 = vmatprep.subr.mxu0 0.0
    %171 = vmatpush1.msra.mxu0 0.0
    %172 = vmatprep.mubr.f32.mxu0 0.0
    %173 = vmatmul.mubr.f32.gmra.mrb[0].mxu0 %v91
    %v174 = vpop.f32.mrb[0].mxu0
    %v175 = vadd.f32 0.0, %v174
    %v176 = vpop.f32.mrb[0].mxu0
    %177 = vdwg.mxu0
    %v178 = vrot.slane %v175, 4
    %v179 = vadd.f32 %v175, %v178
    %v180 = vrot.slane %v179, 2
    %v181 = vadd.f32 %v179, %v180
    %v182 = vrot.slane %v181, 1
    %v183 = vadd.f32 %v181, %v182
    %v184 = vmul.f32 %v183, %v66
    %v185 = vsub.f32 %v175, %v184
    %v186 = vmul.f32 %v185, %v185
    %v187 = vrot.slane %v186, 4
    %v188 = vadd.f32 %v186, %v187
    %v189 = vrot.slane %v188, 2
    %v190 = vadd.f32 %v188, %v189
    %v191 = vrot.slane %v190, 1
    %v192 = vadd.f32 %v190, %v191
    %v193 = vmul.f32 %v192, %v66
    %v194 = vadd.f32 %v193, 1e-05
    %v195 = vrsqrt.pop %v194
    %v196 = vmul.f32 %v195, %v55
    %v197 = vmul.f32 %v184, %v196
    %v198 = vsub.f32 %v56, %v197
    %v199 = vlaneseq
    %v200 = vshrl.u32 %v199, 7
    %v201 = vsub.s32 0, %v200
    %v202 = vrot.slane %v196, %v201
    %v203 = vmul.f32 %v175, %v202
    %v204 = vlaneseq
    %v205 = vshrl.u32 %v204, 7
    %v206 = vsub.s32 0, %v205
    %v207 = vrot.slane %v198, %v206
    %v208 = vadd.f32 %v203, %v207
    %vm209 = vcmp.gt.f32.partialorder %v208, 0.0
    %v210 = vmul.f32 %v208, 0.01
    %v211 = vsel %vm209, %v208, %v210
    %s212 = scalar_lea.vmem [#allocation7], 128
    %v213 = vld [vmem:[%s212] sm:$0xff]
    %v214 = vld [vmem:[%s212 + $0x8] sm:$0xff]
    %v215 = vld [vmem:[%s212 + $0x10] sm:$0xff]
    %v216 = vld [vmem:[%s212 + $0x18] sm:$0xff]
    %v217 = vld [vmem:[%s212 + $0x20] sm:$0xff]
    %v218 = vld [vmem:[%s212 + $0x28] sm:$0xff]
    %v219 = vld [vmem:[%s212 + $0x30] sm:$0xff]
    %v220 = vld [vmem:[%s212 + $0x38] sm:$0xff]
    %v221 = vld [vmem:[%s212 + $0x40] sm:$0xff]
    %v222 = vld [vmem:[%s212 + $0x48] sm:$0xff]
    %v223 = vld [vmem:[%s212 + $0x50] sm:$0xff]
    %v224 = vld [vmem:[%s212 + $0x58] sm:$0xff]
    %v225 = vld [vmem:[%s212 + $0x60] sm:$0xff]
    %v226 = vld [vmem:[%s212 + $0x68] sm:$0xff]
    %v227 = vld [vmem:[%s212 + $0x70] sm:$0xff]
    %v228 = vld [vmem:[%s212 + $0x78] sm:$0xff]
    %229 = vmatprep.subr.mxu0 0.0
    %230 = vmatpush1.msra.mxu0 %v213
    %231 = vmatprep.subr.mxu0 0.0
    %232 = vmatpush1.msra.mxu0 %v214
    %233 = vmatprep.subr.mxu0 0.0
    %234 = vmatpush1.msra.mxu0 %v215
    %235 = vmatprep.subr.mxu0 0.0
    %236 = vmatpush1.msra.mxu0 %v216
    %237 = vmatprep.subr.mxu0 0.0
    %238 = vmatpush1.msra.mxu0 %v217
    %239 = vmatprep.subr.mxu0 0.0
    %240 = vmatpush1.msra.mxu0 %v218
    %241 = vmatprep.subr.mxu0 0.0
    %242 = vmatpush1.msra.mxu0 %v219
    %243 = vmatprep.subr.mxu0 0.0
    %244 = vmatpush1.msra.mxu0 %v220
    %245 = vmatprep.subr.mxu0 0.0
    %246 = vmatpush1.msra.mxu0 %v221
    %247 = vmatprep.subr.mxu0 0.0
    %248 = vmatpush1.msra.mxu0 %v222
    %249 = vmatprep.subr.mxu0 0.0
    %250 = vmatpush1.msra.mxu0 %v223
    %251 = vmatprep.subr.mxu0 0.0
    %252 = vmatpush1.msra.mxu0 %v224
    %253 = vmatprep.subr.mxu0 0.0
    %254 = vmatpush1.msra.mxu0 %v225
    %255 = vmatprep.subr.mxu0 0.0
    %256 = vmatpush1.msra.mxu0 %v226
    %257 = vmatprep.subr.mxu0 0.0
    %258 = vmatpush1.msra.mxu0 %v227
    %259 = vmatprep.subr.mxu0 0.0
    %260 = vmatpush1.msra.mxu0 %v228
    %261 = vmatprep.subr.mxu0 0.0
    %262 = vmatpush1.msra.mxu0 0.0
    %263 = vmatprep.subr.mxu0 0.0
    %264 = vmatpush1.msra.mxu0 0.0
    %265 = vmatprep.subr.mxu0 0.0
    %266 = vmatpush1.msra.mxu0 0.0
    %267 = vmatprep.subr.mxu0 0.0
    %268 = vmatpush1.msra.mxu0 0.0
    %269 = vmatprep.subr.mxu0 0.0
    %270 = vmatpush1.msra.mxu0 0.0
    %271 = vmatprep.subr.mxu0 0.0
    %272 = vmatpush1.msra.mxu0 0.0
    %273 = vmatprep.subr.mxu0 0.0
    %274 = vmatpush1.msra.mxu0 0.0
    %275 = vmatprep.subr.mxu0 0.0
    %276 = vmatpush1.msra.mxu0 0.0
    %277 = vmatprep.subr.mxu0 0.0
    %278 = vmatpush1.msra.mxu0 0.0
    %279 = vmatprep.subr.mxu0 0.0
    %280 = vmatpush1.msra.mxu0 0.0
    %281 = vmatprep.subr.mxu0 0.0
    %282 = vmatpush1.msra.mxu0 0.0
    %283 = vmatprep.subr.mxu0 0.0
    %284 = vmatpush1.msra.mxu0 0.0
    %285 = vmatprep.subr.mxu0 0.0
    %286 = vmatpush1.msra.mxu0 0.0
    %287 = vmatprep.subr.mxu0 0.0
    %288 = vmatpush1.msra.mxu0 0.0
    %289 = vmatprep.subr.mxu0 0.0
    %290 = vmatpush1.msra.mxu0 0.0
    %291 = vmatprep.subr.mxu0 0.0
    %292 = vmatpush1.msra.mxu0 0.0
    %293 = vmatprep.mubr.f32.mxu0 0.0
    %294 = vmatmul.mubr.f32.gmra.mrb[0].mxu0 %v211
    %v295 = vpop.f32.mrb[0].mxu0
    %v296 = vadd.f32 0.0, %v295
    %v297 = vpop.f32.mrb[0].mxu0
    %298 = vdwg.mxu0
    %v299 = vrot.slane %v296, 4
    %v300 = vadd.f32 %v296, %v299
    %v301 = vrot.slane %v300, 2
    %v302 = vadd.f32 %v300, %v301
    %v303 = vrot.slane %v302, 1
    %v304 = vadd.f32 %v302, %v303
    %v305 = vmul.f32 %v304, %v66
    %v306 = vsub.f32 %v296, %v305
    %v307 = vmul.f32 %v306, %v306
    %v308 = vrot.slane %v307, 4
    %v309 = vadd.f32 %v307, %v308
    %v310 = vrot.slane %v309, 2
    %v311 = vadd.f32 %v309, %v310
    %v312 = vrot.slane %v311, 1
    %v313 = vadd.f32 %v311, %v312
    %v314 = vmul.f32 %v313, %v66
    %v315 = vadd.f32 %v314, 1e-05
    %v316 = vrsqrt.pop %v315
    %v317 = vmul.f32 %v316, %v57
    %v318 = vmul.f32 %v305, %v317
    %v319 = vsub.f32 %v58, %v318
    %v320 = vlaneseq
    %v321 = vshrl.u32 %v320, 7
    %v322 = vsub.s32 0, %v321
    %v323 = vrot.slane %v317, %v322
    %v324 = vmul.f32 %v296, %v323
    %v325 = vlaneseq
    %v326 = vshrl.u32 %v325, 7
    %v327 = vsub.s32 0, %v326
    %v328 = vrot.slane %v319, %v327
    %v329 = vadd.f32 %v324, %v328
    %vm330 = vcmp.gt.f32.partialorder %v329, 0.0
    %v331 = vmul.f32 %v329, 0.01
    %v332 = vsel %vm330, %v329, %v331
    %s333 = scalar_lea.vmem [#allocation7], 256
    %v334 = vld [vmem:[%s333] sm:$0xff]
    %v335 = vld [vmem:[%s333 + $0x8] sm:$0xff]
    %v336 = vld [vmem:[%s333 + $0x10] sm:$0xff]
    %v337 = vld [vmem:[%s333 + $0x18] sm:$0xff]
    %v338 = vld [vmem:[%s333 + $0x20] sm:$0xff]
    %v339 = vld [vmem:[%s333 + $0x28] sm:$0xff]
    %v340 = vld [vmem:[%s333 + $0x30] sm:$0xff]
    %v341 = vld [vmem:[%s333 + $0x38] sm:$0xff]
    %v342 = vld [vmem:[%s333 + $0x40] sm:$0xff]
    %v343 = vld [vmem:[%s333 + $0x48] sm:$0xff]
    %v344 = vld [vmem:[%s333 + $0x50] sm:$0xff]
    %v345 = vld [vmem:[%s333 + $0x58] sm:$0xff]
    %v346 = vld [vmem:[%s333 + $0x60] sm:$0xff]
    %v347 = vld [vmem:[%s333 + $0x68] sm:$0xff]
    %v348 = vld [vmem:[%s333 + $0x70] sm:$0xff]
    %v349 = vld [vmem:[%s333 + $0x78] sm:$0xff]
    %v350 = vlaneseq
    %v351 = vshrl.u32 %v350, 7
    %v352 = vsub.s32 0, %v351
    %v353 = vrot.slane %v59, %v352
    %354 = vmatprep.subr.mxu0 0.0
    %355 = vmatpush1.msra.mxu0 %v334
    %356 = vmatprep.subr.mxu0 0.0
    %357 = vmatpush1.msra.mxu0 %v335
    %358 = vmatprep.subr.mxu0 0.0
    %359 = vmatpush1.msra.mxu0 %v336
    %360 = vmatprep.subr.mxu0 0.0
    %361 = vmatpush1.msra.mxu0 %v337
    %362 = vmatprep.subr.mxu0 0.0
    %363 = vmatpush1.msra.mxu0 %v338
    %364 = vmatprep.subr.mxu0 0.0
    %365 = vmatpush1.msra.mxu0 %v339
    %366 = vmatprep.subr.mxu0 0.0
    %367 = vmatpush1.msra.mxu0 %v340
    %368 = vmatprep.subr.mxu0 0.0
    %369 = vmatpush1.msra.mxu0 %v341
    %370 = vmatprep.subr.mxu0 0.0
    %371 = vmatpush1.msra.mxu0 %v342
    %372 = vmatprep.subr.mxu0 0.0
    %373 = vmatpush1.msra.mxu0 %v343
    %374 = vmatprep.subr.mxu0 0.0
    %375 = vmatpush1.msra.mxu0 %v344
    %376 = vmatprep.subr.mxu0 0.0
    %377 = vmatpush1.msra.mxu0 %v345
    %378 = vmatprep.subr.mxu0 0.0
    %379 = vmatpush1.msra.mxu0 %v346
    %380 = vmatprep.subr.mxu0 0.0
    %381 = vmatpush1.msra.mxu0 %v347
    %382 = vmatprep.subr.mxu0 0.0
    %383 = vmatpush1.msra.mxu0 %v348
    %384 = vmatprep.subr.mxu0 0.0
    %385 = vmatpush1.msra.mxu0 %v349
    %386 = vmatprep.subr.mxu0 0.0
    %387 = vmatpush1.msra.mxu0 0.0
    %388 = vmatprep.subr.mxu0 0.0
    %389 = vmatpush1.msra.mxu0 0.0
    %390 = vmatprep.subr.mxu0 0.0
    %391 = vmatpush1.msra.mxu0 0.0
    %392 = vmatprep.subr.mxu0 0.0
    %393 = vmatpush1.msra.mxu0 0.0
    %394 = vmatprep.subr.mxu0 0.0
    %395 = vmatpush1.msra.mxu0 0.0
    %396 = vmatprep.subr.mxu0 0.0
    %397 = vmatpush1.msra.mxu0 0.0
    %398 = vmatprep.subr.mxu0 0.0
    %399 = vmatpush1.msra.mxu0 0.0
    %400 = vmatprep.subr.mxu0 0.0
    %401 = vmatpush1.msra.mxu0 0.0
    %402 = vmatprep.subr.mxu0 0.0
    %403 = vmatpush1.msra.mxu0 0.0
    %404 = vmatprep.subr.mxu0 0.0
    %405 = vmatpush1.msra.mxu0 0.0
    %406 = vmatprep.subr.mxu0 0.0
    %407 = vmatpush1.msra.mxu0 0.0
    %408 = vmatprep.subr.mxu0 0.0
    %409 = vmatpush1.msra.mxu0 0.0
    %410 = vmatprep.subr.mxu0 0.0
    %411 = vmatpush1.msra.mxu0 0.0
    %412 = vmatprep.subr.mxu0 0.0
    %413 = vmatpush1.msra.mxu0 0.0
    %414 = vmatprep.subr.mxu0 0.0
    %415 = vmatpush1.msra.mxu0 0.0
    %416 = vmatprep.subr.mxu0 0.0
    %417 = vmatpush1.msra.mxu0 0.0
    %418 = vmatprep.mubr.f32.mxu0 0.0
    %419 = vmatmul.mubr.f32.gmra.mrb[0].mxu0 %v332
    %v420 = vpop.f32.mrb[0].mxu0
    %v421 = vadd.f32 %v353, %v420
    %v422 = vpop.f32.mrb[0].mxu0
    %423 = vdwg.mxu0
    %424 = vst [vmem:[#allocation8] sm:$0xff] %v421
    // Predicated region
    $region26: #{tpu_custom_call.1} parent=1 // pred_check
      _
    $region27: #{tpu_custom_call.1} parent=1 // pred_check_branch
      %426 = sbr.rel (0) target = $region29
    $region28: #{tpu_custom_call.1} parent=1 // pred_region
      %s428 = ssub.s32 128, 128
      %429 = vsyncadd [#allocation4], %s428
      %s431 = sshll.u32 [#allocation8], 4
      %s432 = int_to_ptr.vmem [resolvable:$true] %s431
      %434 = dma.vmem_to_hbm [thread:$0]  %s432, 128, %s3, [#allocation4]
    $region29: #{tpu_custom_call.1} parent=1 // pred_fallthru
      _
    // Predicated region
    $region30: #{tpu_custom_call.1} parent=1 // pred_check
      _
    $region31: #{tpu_custom_call.1} parent=1 // pred_check_branch
      %436 = sbr.rel (0) target = $region33
    $region32: #{tpu_custom_call.1} parent=1 // pred_region
      %437 = dma.done [#allocation4], 128
    $region33: #{tpu_custom_call.1} parent=1 // pred_fallthru
      _
    %438 = vsyncpa [#allocation3], 1
    %439 = vsyncpa [#allocation6], 1
    %440 = vsyncpa [#allocation4], 1

</llo_original>
